<compile_context>
chip_gen: v6e
topology: v6e:2x2x1
jax: 0.10.0
libtpu: 0.0.40
codegen_flags: <defaults>
</compile_context>

<pallas_src>
import functools

import jax
import jax.numpy as jnp
from jax import lax
from jax.experimental import pallas as pl
from jax.experimental.pallas import tpu as pltpu


def _round_up(x: int, m: int) -> int:
    return ((x + m - 1) // m) * m


def _pick_tile(dim: int, d: int, itemsize: int) -> int:
    """Tile size: big (MXU-aligned 512) by default, shrink if D is huge."""
    budget = 20 * 1024 * 1024  # approx VMEM for double-buffered inputs + sim temps
    t = 512
    while t > 128 and (4 * t * d * itemsize + 8 * t * t) > budget:
        t //= 2
    # If the whole dim fits in one tile, use the (8-aligned) full dim instead.
    return min(t, _round_up(dim, 8))


def _ss_loss_tile_kernel(e1_ref, e2_ref, inv1_ref, inv2_ref, out_ref,
                         *, n_valid: int, m_valid: int):
    i = pl.program_id(0)
    j = pl.program_id(1)
    tm = e1_ref.shape[0]
    tn = e2_ref.shape[0]

    # MXU matmul in the input dtype, f32 accumulation: sim_raw = e1 @ e2.T
    sim = lax.dot_general(
        e1_ref[...], e2_ref[...],
        dimension_numbers=(((1,), (1,)), ((), ())),
        preferred_element_type=jnp.float32,
    )                                                    # (tm, tn) f32

    # Post-matmul normalization with hoisted inverse row norms (f32).
    # Padded rows/cols carry inv-norm 0 -> sim == 0 there.
    sim = sim * inv1_ref[...] * inv2_ref[...]            # (tm,1) and (1,tn) broadcast

    # Off-diagonal contribution: relu(sim).  Per-tile partial sum to SMEM.
    out_ref[0, 0] = jnp.sum(jnp.maximum(sim, 0.0))

    # Diagonal correction only on tiles intersecting the global diagonal.
    row0 = i * tm
    col0 = j * tn
    intersects = jnp.logical_and(row0 < col0 + tn, col0 < row0 + tm)

    @pl.when(intersects)
    def _():
        row = lax.broadcasted_iota(jnp.int32, (tm, tn), 0) + row0
        col = lax.broadcasted_iota(jnp.int32, (tm, tn), 1) + col0
        diag = jnp.logical_and(
            row == col,
            jnp.logical_and(row < n_valid, col < m_valid))
        corr = jnp.where(diag, (1.0 - sim) - jnp.maximum(sim, 0.0), 0.0)
        out_ref[0, 0] += jnp.sum(corr)


def self_supervised_loss(emb_1: jax.Array, emb_2: jax.Array) -> jax.Array:
    """Pallas implementation of SelfSupervisedLoss.forward.  Returns a scalar."""
    n, d = emb_1.shape
    m, d2 = emb_2.shape
    assert d == d2, "feature dims must match"
    eps = 1e-12

    # Cheap O((N+M)*D) prologue: inverse L2 row norms, computed once in f32.
    # (rsqrt(max(sumsq, eps^2)) == 1 / max(||x||, eps), matching F.normalize.)
    inv1 = lax.rsqrt(jnp.maximum(
        jnp.sum(emb_1.astype(jnp.float32) ** 2, axis=1, keepdims=True),
        eps * eps))                                       # (n, 1)
    inv2 = lax.rsqrt(jnp.maximum(
        jnp.sum(emb_2.astype(jnp.float32) ** 2, axis=1),
        eps * eps))[None, :]                              # (1, m)

    itemsize = jnp.dtype(emb_1.dtype).itemsize
    tm = _pick_tile(n, d, itemsize)
    tn = _pick_tile(m, d, itemsize)
    n_pad = _round_up(n, tm)
    m_pad = _round_up(m, tn)

    e1 = jnp.pad(emb_1, ((0, n_pad - n), (0, 0))) if n_pad != n else emb_1
    e2 = jnp.pad(emb_2, ((0, m_pad - m), (0, 0))) if m_pad != m else emb_2
    i1 = jnp.pad(inv1, ((0, n_pad - n), (0, 0))) if n_pad != n else inv1
    i2 = jnp.pad(inv2, ((0, 0), (0, m_pad - m))) if m_pad != m else inv2

    grid = (n_pad // tm, m_pad // tn)
    kernel = functools.partial(_ss_loss_tile_kernel, n_valid=n, m_valid=m)

    partials = pl.pallas_call(
        kernel,
        out_shape=jax.ShapeDtypeStruct(grid, jnp.float32),
        grid=grid,
        in_specs=[
            pl.BlockSpec((tm, d), lambda i, j: (i, 0)),   # e1 tile (native dtype)
            pl.BlockSpec((tn, d), lambda i, j: (j, 0)),   # e2 tile (native dtype)
            pl.BlockSpec((tm, 1), lambda i, j: (i, 0)),   # inv row norms of e1
            pl.BlockSpec((1, tn), lambda i, j: (0, j)),   # inv row norms of e2
        ],
        out_specs=pl.BlockSpec((1, 1), lambda i, j: (i, j),
                               memory_space=pltpu.SMEM),
        compiler_params=pltpu.CompilerParams(
            dimension_semantics=("parallel", "parallel"),
            vmem_limit_bytes=64 * 1024 * 1024,
        ),
    )(e1, e2, i1, i2)

    # Tiny (num_i, num_j) partial-sum matrix; finish the mean outside.
    return jnp.sum(partials) / jnp.float32(n * m)


def _reference(emb_1, emb_2):
    # Pure-JAX reference for a quick sanity check.
    eps = 1e-12
    e1 = emb_1 / jnp.maximum(jnp.linalg.norm(emb_1, axis=1, keepdims=True), eps)
    e2 = emb_2 / jnp.maximum(jnp.linalg.norm(emb_2, axis=1, keepdims=True), eps)
    sim = e1 @ e2.T
    n, m = sim.shape
    eye = jnp.eye(n, m)
    pos = (1.0 - sim) * eye
    neg = jnp.maximum(sim, 0.0) * (1.0 - eye)
    return jnp.mean(pos + neg)


if __name__ == "__main__":
    key = jax.random.PRNGKey(0)
    k1, k2, k3, k4 = jax.random.split(key, 4)

    # Small shapes consistent with the module: two batches of embeddings.
    N, M, D = 8, 8, 32
    emb_1 = jax.random.normal(k1, (N, D), dtype=jnp.float32)
    emb_2 = jax.random.normal(k2, (M, D), dtype=jnp.float32)

    loss = jax.block_until_ready(self_supervised_loss(emb_1, emb_2))
    ref = _reference(emb_1, emb_2)
    assert jnp.allclose(loss, ref, atol=1e-5, rtol=1e-5), (loss, ref)

    # Non-square / non-tile-multiple shapes exercise padding + global-diag masking.
    N2, M2, D2 = 12, 20, 32
    emb_3 = jax.random.normal(k3, (N2, D2), dtype=jnp.float32)
    emb_4 = jax.random.normal(k4, (M2, D2), dtype=jnp.float32)
    loss2 = jax.block_until_ready(self_supervised_loss(emb_3, emb_4))
    ref2 = _reference(emb_3, emb_4)
    assert jnp.allclose(loss2, ref2, atol=1e-5, rtol=1e-5), (loss2, ref2)

    print("KERNEL_OK")
</pallas_src>

<mosaic_0001>
module attributes {stable_mosaic.version = 11 : i64} {
  func.func @_ss_loss_tile_kernel(%arg0: i32, %arg1: i32, %arg2: memref<8x32xf32, #tpu.memory_space<vmem>>, %arg3: memref<8x32xf32, #tpu.memory_space<vmem>>, %arg4: memref<8x1xf32, #tpu.memory_space<vmem>>, %arg5: memref<1x8xf32, #tpu.memory_space<vmem>>, %arg6: memref<1x1xf32, #tpu.memory_space<smem>>) attributes {dimension_semantics = [#tpu.dimension_semantics<parallel>, #tpu.dimension_semantics<parallel>], iteration_bounds = array<i64: 1, 1>, scalar_prefetch = 0 : i64, scratch_operands = 0 : i64, tpu.core_type = #tpu.core_type<tc>, window_params = [{transform_indices = @transform_0, window_bounds = array<i64: 8, 32>}, {transform_indices = @transform_1, window_bounds = array<i64: 8, 32>}, {transform_indices = @transform_2, window_bounds = array<i64: 8, 1>}, {transform_indices = @transform_3, window_bounds = array<i64: 1, 8>}, {transform_indices = @transform_4, window_bounds = array<i64: 1, 1>}]} {
    %c0 = arith.constant 0 : index
    %c0_0 = arith.constant 0 : index
    %0 = vector.load %arg2[%c0, %c0_0] : memref<8x32xf32, #tpu.memory_space<vmem>>, vector<8x32xf32>
    %c0_1 = arith.constant 0 : index
    %c0_2 = arith.constant 0 : index
    %1 = vector.load %arg3[%c0_1, %c0_2] : memref<8x32xf32, #tpu.memory_space<vmem>>, vector<8x32xf32>
    %cst = arith.constant dense<0.000000e+00> : vector<8x8xf32>
    %2 = tpu.matmul %0, %1, %cst {dimension_numbers = #tpu.dot_dimension_numbers<[1], [1], [0], [0], [0, 0, 1, 0], [], []>} : vector<8x32xf32>, vector<8x32xf32>, vector<8x8xf32> -> vector<8x8xf32>
    %c0_3 = arith.constant 0 : index
    %c0_4 = arith.constant 0 : index
    %3 = vector.load %arg4[%c0_3, %c0_4] : memref<8x1xf32, #tpu.memory_space<vmem>>, vector<8x1xf32>
    %4 = vector.broadcast %3 : vector<8x1xf32> to vector<8x8xf32>
    %5 = arith.mulf %2, %4 : vector<8x8xf32>
    %c0_5 = arith.constant 0 : index
    %c0_6 = arith.constant 0 : index
    %6 = vector.load %arg5[%c0_5, %c0_6] : memref<1x8xf32, #tpu.memory_space<vmem>>, vector<1x8xf32>
    %7 = vector.broadcast %6 : vector<1x8xf32> to vector<8x8xf32>
    %8 = arith.mulf %5, %7 : vector<8x8xf32>
    %cst_7 = arith.constant 0.000000e+00 : f32
    %9 = vector.broadcast %cst_7 : f32 to vector<8x8xf32>
    %10 = arith.maximumf %8, %9 : vector<8x8xf32>
    %11 = vector.shape_cast %10 : vector<8x8xf32> to vector<1x8x8xf32>
    %cst_8 = arith.constant dense<0.000000e+00> : vector<1xf32>
    %12 = vector.multi_reduction <add>, %11, %cst_8 [1, 2] : vector<1x8x8xf32> to vector<1xf32>
    %13 = vector.shape_cast %12 : vector<1xf32> to vector<1x1x1xf32>
    %14 = vector.extract %13[0, 0, 0] : f32 from vector<1x1x1xf32>
    %c0_9 = arith.constant 0 : index
    %c0_10 = arith.constant 0 : index
    %15 = memref.load %arg6[%c0_9, %c0_10] : memref<1x1xf32, #tpu.memory_space<smem>>
    memref.store %14, %arg6[%c0_9, %c0_10] : memref<1x1xf32, #tpu.memory_space<smem>>
    %c8_i32 = arith.constant 8 : i32
    %16 = arith.muli %arg0, %c8_i32 : i32
    %c8_i32_11 = arith.constant 8 : i32
    %17 = arith.muli %arg1, %c8_i32_11 : i32
    %c8_i32_12 = arith.constant 8 : i32
    %18 = arith.addi %17, %c8_i32_12 : i32
    %19 = arith.cmpi slt, %16, %18 : i32
    %c8_i32_13 = arith.constant 8 : i32
    %20 = arith.addi %16, %c8_i32_13 : i32
    %21 = arith.cmpi slt, %17, %20 : i32
    %22 = arith.andi %19, %21 : i1
    %23 = arith.extui %22 : i1 to i32
    %c0_i32 = arith.constant 0 : i32
    %24 = arith.cmpi ne, %23, %c0_i32 : i32
    scf.if %24 {
      %25 = tpu.iota {dimensions = array<i32: 0>} : vector<8x8xi32>
      %26 = vector.broadcast %16 : i32 to vector<8x8xi32>
      %27 = arith.addi %25, %26 : vector<8x8xi32>
      %28 = tpu.iota {dimensions = array<i32: 1>} : vector<8x8xi32>
      %29 = vector.broadcast %17 : i32 to vector<8x8xi32>
      %30 = arith.addi %28, %29 : vector<8x8xi32>
      %31 = arith.cmpi eq, %27, %30 : vector<8x8xi32>
      %c8_i32_14 = arith.constant 8 : i32
      %32 = vector.broadcast %c8_i32_14 : i32 to vector<8x8xi32>
      %33 = arith.cmpi slt, %27, %32 : vector<8x8xi32>
      %c8_i32_15 = arith.constant 8 : i32
      %34 = vector.broadcast %c8_i32_15 : i32 to vector<8x8xi32>
      %35 = arith.cmpi slt, %30, %34 : vector<8x8xi32>
      %36 = arith.andi %33, %35 : vector<8x8xi1>
      %37 = arith.andi %31, %36 : vector<8x8xi1>
      %cst_16 = arith.constant 1.000000e+00 : f32
      %38 = vector.broadcast %cst_16 : f32 to vector<8x8xf32>
      %39 = arith.subf %38, %8 : vector<8x8xf32>
      %cst_17 = arith.constant 0.000000e+00 : f32
      %40 = vector.broadcast %cst_17 : f32 to vector<8x8xf32>
      %41 = arith.maximumf %8, %40 : vector<8x8xf32>
      %42 = arith.subf %39, %41 : vector<8x8xf32>
      %cst_18 = arith.constant 0.000000e+00 : f32
      %43 = vector.broadcast %cst_18 : f32 to vector<8x8xf32>
      %44 = arith.select %37, %42, %43 : vector<8x8xi1>, vector<8x8xf32>
      %c0_19 = arith.constant 0 : index
      %c0_20 = arith.constant 0 : index
      %45 = memref.load %arg6[%c0_19, %c0_20] : memref<1x1xf32, #tpu.memory_space<smem>>
      %46 = vector.shape_cast %44 : vector<8x8xf32> to vector<1x8x8xf32>
      %cst_21 = arith.constant dense<0.000000e+00> : vector<1xf32>
      %47 = vector.multi_reduction <add>, %46, %cst_21 [1, 2] : vector<1x8x8xf32> to vector<1xf32>
      %48 = vector.shape_cast %47 : vector<1xf32> to vector<1x1x1xf32>
      %49 = vector.extract %48[0, 0, 0] : f32 from vector<1x1x1xf32>
      %50 = arith.addf %45, %49 : f32
      %c0_22 = arith.constant 0 : index
      %c0_23 = arith.constant 0 : index
      %51 = memref.load %arg6[%c0_22, %c0_23] : memref<1x1xf32, #tpu.memory_space<smem>>
      memref.store %50, %arg6[%c0_22, %c0_23] : memref<1x1xf32, #tpu.memory_space<smem>>
    } else {
    }
    return
  }
  func.func @transform_0(%arg0: i32, %arg1: i32) -> (i32, i32) {
    %c0_i32 = arith.constant 0 : i32
    %c0_i32_0 = arith.constant 0 : i32
    return %arg0, %c0_i32 : i32, i32
  }
  func.func @transform_1(%arg0: i32, %arg1: i32) -> (i32, i32) {
    %c0_i32 = arith.constant 0 : i32
    %c0_i32_0 = arith.constant 0 : i32
    return %arg1, %c0_i32 : i32, i32
  }
  func.func @transform_2(%arg0: i32, %arg1: i32) -> (i32, i32) {
    %c0_i32 = arith.constant 0 : i32
    %c0_i32_0 = arith.constant 0 : i32
    return %arg0, %c0_i32 : i32, i32
  }
  func.func @transform_3(%arg0: i32, %arg1: i32) -> (i32, i32) {
    %c0_i32 = arith.constant 0 : i32
    %c0_i32_0 = arith.constant 0 : i32
    return %c0_i32, %arg1 : i32, i32
  }
  func.func @transform_4(%arg0: i32, %arg1: i32) -> (i32, i32) {
    %c0_i32 = arith.constant 0 : i32
    return %arg0, %arg1 : i32, i32
  }
}

</mosaic_0001>

<llo_original>
// kernel: tpu_custom_call.1
$region0: #{tpu_custom_call.1}
  #allocation0 [shape = 'u32[]', space=smem, size = 0x4, offset = 0x4, fixed_abs, tag = 'smem constant byte address 0x4 - core index']
  #allocation1 [shape = 'u32[144,128]{1,0:T(1,128)}', space=vmem, size = 0x12000, scoped, tag = 'internal scratch']
  %s0 = inlined_call_operand.vmem [shape: f32[8,32], index: 0, kind: input, shape index: {}]
  %s1 = inlined_call_operand.hbm [shape: f32[8,32], index: 1, kind: input, shape index: {}]
  %s2 = inlined_call_operand.vmem [shape: f32[8,1], index: 2, kind: input, shape index: {}]
  %s3 = inlined_call_operand.vmem [shape: f32[1,8], index: 3, kind: input, shape index: {}]
  %s4 = inlined_call_operand.hbm [shape: f32[1,1], index: 4, kind: output, shape index: {}]
  %s5 = sld [smem:[#allocation0]]
  $region34: #{tpu_custom_call.1} parent=0
    _
  %s7 = ssub.s32 1, %s5
  %s8 = scalar_select 0, %s7, %s5
  $region1: #{tpu_custom_call.1} parent=0
    #allocation2 [shape = 'u8[4096]{0}', space=vmem, size = 0x1000, scoped, tag = 'input window, operand 1, single buffered']
    #allocation3 [shape = 's32[1]{0}', space=sflag, size = 0x4, scoped, tag = 'scoped memory for tpu_custom_call.1']
    #allocation4 [shape = 's32[1]{0}', space=sflag, size = 0x4, scoped, tag = 'scoped memory for tpu_custom_call.1']
    #allocation5 [shape = 'u8[512]{0}', space=smem, size = 0x200, scoped, tag = 'output window, operand 0, single buffered']
    %9 = vsyncpa [#allocation3], 0
    %10 = vsyncpa [#allocation4], 0
    // Predicated region
    $region2: #{tpu_custom_call.1} parent=1 // pred_check
      _
    $region3: #{tpu_custom_call.1} parent=1 // pred_check_branch
      %12 = sbr.rel (0) target = $region5
    $region4: #{tpu_custom_call.1} parent=1 // pred_region
      _
    $region5: #{tpu_custom_call.1} parent=1 // pred_fallthru
      _
    // Predicated region
    $region6: #{tpu_custom_call.1} parent=1 // pred_check
      _
    $region7: #{tpu_custom_call.1} parent=1 // pred_check_branch
      %14 = sbr.rel (0) target = $region9
    $region8: #{tpu_custom_call.1} parent=1 // pred_region
      %s16 = ssub.s32 128, 128
      %17 = vsyncadd [#allocation3], %s16
      %s19 = sshll.u32 [#allocation2], 4
      %s20 = int_to_ptr.vmem [resolvable:$true] %s19
      %22 = dma.hbm_to_vmem [thread:$0]  %s1, 128, %s20, [#allocation3]
    $region9: #{tpu_custom_call.1} parent=1 // pred_fallthru
      _
    // Predicated region
    $region10: #{tpu_custom_call.1} parent=1 // pred_check
      _
    $region11: #{tpu_custom_call.1} parent=1 // pred_check_branch
      %24 = sbr.rel (0) target = $region13
    $region12: #{tpu_custom_call.1} parent=1 // pred_region
      _
    $region13: #{tpu_custom_call.1} parent=1 // pred_fallthru
      _
    // Predicated region
    $region14: #{tpu_custom_call.1} parent=1 // pred_check
      _
    $region15: #{tpu_custom_call.1} parent=1 // pred_check_branch
      %26 = sbr.rel (0) target = $region17
    $region16: #{tpu_custom_call.1} parent=1 // pred_region
      _
    $region17: #{tpu_custom_call.1} parent=1 // pred_fallthru
      _
    // Predicated region
    $region18: #{tpu_custom_call.1} parent=1 // pred_check
      _
    $region19: #{tpu_custom_call.1} parent=1 // pred_check_branch
      %28 = sbr.rel (0) target = $region21
    $region20: #{tpu_custom_call.1} parent=1 // pred_region
      %29 = dma.done [#allocation3], 128
    $region21: #{tpu_custom_call.1} parent=1 // pred_fallthru
      _
    %v30 = vld [vmem:[%s0] sm:$0xff]
    %v31 = vld [vmem:[#allocation2] sm:$0xff]
    %vm32 = vcmask 261120
    %v34 = vsel %vm32, %v30, 0
    %v37 = vsel %vm32, %v31, 0
    %39 = vmatprep.subr.mxu0 0.0
    %40 = vmatpush1.xpose.msra.mxu0 0.0
    %41 = vmatprep.subr.mxu0 0.0
    %42 = vmatpush1.xpose.msra.mxu0 0.0
    %43 = vmatprep.subr.mxu0 0.0
    %44 = vmatpush1.xpose.msra.mxu0 0.0
    %45 = vmatprep.subr.mxu0 0.0
    %46 = vmatpush1.xpose.msra.mxu0 0.0
    %47 = vmatprep.subr.mxu0 0.0
    %48 = vmatpush1.xpose.msra.mxu0 0.0
    %49 = vmatprep.subr.mxu0 0.0
    %50 = vmatpush1.xpose.msra.mxu0 0.0
    %51 = vmatprep.subr.mxu0 0.0
    %52 = vmatpush1.xpose.msra.mxu0 0.0
    %53 = vmatprep.subr.mxu0 0.0
    %54 = vmatpush1.xpose.msra.mxu0 0.0
    %55 = vmatprep.subr.mxu0 0.0
    %56 = vmatpush1.xpose.msra.mxu0 0.0
    %57 = vmatprep.subr.mxu0 0.0
    %58 = vmatpush1.xpose.msra.mxu0 0.0
    %59 = vmatprep.subr.mxu0 0.0
    %60 = vmatpush1.xpose.msra.mxu0 0.0
    %61 = vmatprep.subr.mxu0 0.0
    %62 = vmatpush1.xpose.msra.mxu0 0.0
    %63 = vmatprep.subr.mxu0 0.0
    %64 = vmatpush1.xpose.msra.mxu0 0.0
    %65 = vmatprep.subr.mxu0 0.0
    %66 = vmatpush1.xpose.msra.mxu0 0.0
    %67 = vmatprep.subr.mxu0 0.0
    %68 = vmatpush1.xpose.msra.mxu0 0.0
    %69 = vmatprep.subr.mxu0 0.0
    %70 = vmatpush1.xpose.msra.mxu0 %v37
    %71 = vmatprep.subr.mxu0 0.0
    %72 = vmatpush2.xpose.msra.mxu0 0.0
    %73 = vmatprep.subr.mxu0 0.0
    %74 = vmatpush2.xpose.msra.mxu0 0.0
    %75 = vmatprep.subr.mxu0 0.0
    %76 = vmatpush2.xpose.msra.mxu0 0.0
    %77 = vmatprep.subr.mxu0 0.0
    %78 = vmatpush2.xpose.msra.mxu0 0.0
    %79 = vmatprep.subr.mxu0 0.0
    %80 = vmatpush2.xpose.msra.mxu0 0.0
    %81 = vmatprep.subr.mxu0 0.0
    %82 = vmatpush2.xpose.msra.mxu0 0.0
    %83 = vmatprep.subr.mxu0 0.0
    %84 = vmatpush2.xpose.msra.mxu0 0.0
    %85 = vmatprep.subr.mxu0 0.0
    %86 = vmatpush2.xpose.msra.mxu0 0.0
    %87 = vmatprep.subr.mxu0 0.0
    %88 = vmatpush2.xpose.msra.mxu0 0.0
    %89 = vmatprep.subr.mxu0 0.0
    %90 = vmatpush2.xpose.msra.mxu0 0.0
    %91 = vmatprep.subr.mxu0 0.0
    %92 = vmatpush2.xpose.msra.mxu0 0.0
    %93 = vmatprep.subr.mxu0 0.0
    %94 = vmatpush2.xpose.msra.mxu0 0.0
    %95 = vmatprep.subr.mxu0 0.0
    %96 = vmatpush2.xpose.msra.mxu0 0.0
    %97 = vmatprep.subr.mxu0 0.0
    %98 = vmatpush2.xpose.msra.mxu0 0.0
    %99 = vmatprep.subr.mxu0 0.0
    %100 = vmatpush2.xpose.msra.mxu0 0.0
    %101 = vmatprep.subr.mxu0 0.0
    %102 = vmatpush2.xpose.msra.mxu0 0.0
    %103 = vmatprep.mubr.f32.mxu0 0.0
    %104 = vmatmul.mubr.f32.gmra.mxu0 %v34
    %v105 = vpop.f32.mrf.mxu0
    %v106 = vadd.f32 0.0, %v105
    %v107 = vpop.f32.mrf.mxu0
    %108 = vdwg.mxu0
    %v109 = vld [vmem:[%s2] sm:$0xff]
    %111 = vset.pattern.permute.xlu0 0
    %112 = vperm.xlu0 %111, %v109
    %v113 = vpop.permute.xlu0 %112
    %v115 = vmul.f32 %v106, %v113
    %v116 = vld [vmem:[%s3] sm:$0x1]
    %v118 = vlaneseq
    %v119 = vshrl.u32 %v118, 7
    %v120 = vsub.s32 0, %v119
    %v121 = vrot.slane %v116, %v120
    %v123 = vmul.f32 %v115, %v121
    %v124 = vmax.f32 %v123, 0.0
    %vm125 = vcmask 64512
    %v126 = vsel %vm125, %v124, 0.0
    %127 = vadd.xlane.f32.xlu0 %v126
    %v128 = vpop.xlane.xlu0 %127
    %v129 = vrot.slane %v128, 4
    %v130 = vadd.f32 %v128, %v129
    %v131 = vrot.slane %v130, 2
    %v132 = vadd.f32 %v130, %v131
    %v133 = vrot.slane %v132, 1
    %v134 = vadd.f32 %v132, %v133
    %s135 = vtos %v134
    %s136 = scalar_lea.smem [#allocation5], 0
    %137 = sst [smem:[%s136]] %s135
    %s138 = smul.u32 0, 8
    %s139 = smul.u32 0, 8
    %s140 = sadd.s32 %s139, 8
    %p141 = scmp.lt.s32.totalorder %s138, %s140
    %s142 = sadd.s32 %s138, 8
    %p143 = scmp.lt.s32.totalorder %s139, %s142
    %p144 = pnand %p141, %p143
    %p145 = pneg %p144
    // Predicated region
    $region22: #{tpu_custom_call.1} parent=1 // pred_check
      _
    $region23: #{tpu_custom_call.1} parent=1 // pred_check_branch
      %147 = sbr.rel (%p144) target = $region25
    $region24: #{tpu_custom_call.1} parent=1 // pred_region
      %v148 = vlaneseq
      %v149 = vshrl.u32 %v148, 7
      %v150 = vstv %s138
      %v151 = vadd.s32 %v149, %v150
      %v152 = vlaneseq
      %v153 = vand.u32 %v152, 127
      %v154 = vstv %s139
      %v155 = vadd.s32 %v153, %v154
      %vm156 = vcmp.eq.s32.totalorder %v151, %v155
      %vm157 = vcmp.lt.s32.totalorder %v151, 8
      %vm158 = vcmp.lt.s32.totalorder %v155, 8
      %vm159 = vmand %vm157, %vm158
      %vm160 = vmand %vm156, %vm159
      %v161 = vsub.f32 1.0, %v123
      %v162 = vsub.f32 %v161, %v124
      %v163 = vsel %vm160, %v162, 0.0
      %s164 = sld [smem:[#allocation5]]
      %v165 = vsel %vm125, %v163, 0.0
      %166 = vadd.xlane.f32.xlu0 %v165
      %v167 = vpop.xlane.xlu0 %166
      %v168 = vrot.slane %v167, 4
      %v169 = vadd.f32 %v167, %v168
      %v170 = vrot.slane %v169, 2
      %v171 = vadd.f32 %v169, %v170
      %v172 = vrot.slane %v171, 1
      %v173 = vadd.f32 %v171, %v172
      %s174 = vtos %v173
      %s175 = sadd.f32 %s164, %s174
      %176 = sst [smem:[%s136]] %s175
    $region25: #{tpu_custom_call.1} parent=1 // pred_fallthru
      _
    // Predicated region
    $region26: #{tpu_custom_call.1} parent=1 // pred_check
      _
    $region27: #{tpu_custom_call.1} parent=1 // pred_check_branch
      %178 = sbr.rel (0) target = $region29
    $region28: #{tpu_custom_call.1} parent=1 // pred_region
      %s180 = ssub.s32 16, 16
      %181 = vsyncadd [#allocation4], %s180
      %184 = dma.smem_to_hbm [#allocation5], 16, %s4, [#allocation4]
    $region29: #{tpu_custom_call.1} parent=1 // pred_fallthru
      _
    // Predicated region
    $region30: #{tpu_custom_call.1} parent=1 // pred_check
      _
    $region31: #{tpu_custom_call.1} parent=1 // pred_check_branch
      %186 = sbr.rel (0) target = $region33
    $region32: #{tpu_custom_call.1} parent=1 // pred_region
      %187 = dma.done [#allocation4], 16
    $region33: #{tpu_custom_call.1} parent=1 // pred_fallthru
      _
    %188 = sfence
    %189 = vsyncpa [#allocation3], 1
    %190 = vsyncpa [#allocation4], 1

</llo_original>
